<compile_context>
chip_gen: v7x
topology: tpu7x:2x2x1
jax: 0.10.0
libtpu: 0.0.40
codegen_flags: <defaults>
</compile_context>

<pallas_src>
import jax
import jax.numpy as jnp
from jax import lax
from jax.experimental import pallas as pl
from jax.experimental.pallas import tpu as pltpu


def _round_up(a, m):
    return ((a + m - 1) // m) * m


def attack_dict_kernel(v_ref, d_ref, x_ref, w_ref, b_ref, logits_ref, dv_ref):
    """One (batch-tile, feature-tile) step of the fused attack forward.

    v_ref      : (TB, K)    gathered codes v[index]
    d_ref      : (TP, K)    dictionary slice, flattened-pixel major (no host transpose)
    x_ref      : (TB, TP)   flattened clean inputs
    w_ref      : (TP, NCp)  classifier weight slice (NC zero-padded to lane width)
    b_ref      : (1, NCp)   classifier bias (zero-padded)
    logits_ref : (TB, NCp)  resident accumulator across the P ("arbitrary") grid axis
    dv_ref     : (TB, TP)   perturbation tile
    """
    p = pl.program_id(1)

    # dv_tile[b, p] = sum_k v[b, k] * d[p, k]   (tensordot over the K atoms)
    dv = lax.dot_general(
        v_ref[...], d_ref[...],
        dimension_numbers=(((1,), (1,)), ((), ())),
        preferred_element_type=jnp.float32)                    # (TB, TP)
    dv_ref[...] = dv

    x_adv = x_ref[...] + dv                                    # fused elementwise add

    # logits = (x + dv) @ W + b, reduced across the P grid axis.
    @pl.when(p == 0)
    def _():
        logits_ref[...] = jnp.broadcast_to(b_ref[...], logits_ref.shape)

    logits_ref[...] += jnp.dot(x_adv, w_ref[...],
                               preferred_element_type=jnp.float32)


def attack_dict_forward(x, index, v, d, w, b, *, tb=None, tp=None):
    """Reproduces Attack_dict_model.forward with a synthetic linear `model`.

    x : (B, C, H, W) f32, index : (B,) i32, v : (N, K) f32, d : (C, H, W, K) f32
    w : (C*H*W, NC) f32, b : (NC,) f32
    Returns (logits (B, NC), dv (B, C, H, W)).
    """
    B, C, H, W = x.shape
    K = d.shape[-1]
    P = C * H * W
    NC = w.shape[-1]

    # Tile sizes: sublane-aligned batch tile, lane-aligned feature tile.  Kept modest
    # so double-buffered tiles fit every generation's default scoped VMEM (v7x: 32 MiB).
    if tb is None:
        tb = min(256, _round_up(B, 8))
    if tp is None:
        tp = min(1024, _round_up(P, 128))
    ncp = _round_up(NC, 128)            # lane-dense logits (avoid masked vst)

    Bp = _round_up(B, tb)
    Pp = _round_up(P, tp)

    # Host-side glue (cheap, no extra HBM pass over d):
    v_sel = jnp.take(v, index, axis=0)                     # (B, K) gather of codes
    d_pk = d.reshape(P, K)                                 # free reshape, natural layout
    x_flat = x.reshape(B, P)                               # NCHW row-major flatten

    # Zero-pad to full tiles; padded rows/cols contribute exactly zero.
    v_sel = jnp.pad(v_sel, ((0, Bp - B), (0, 0)))
    x_flat = jnp.pad(x_flat, ((0, Bp - B), (0, Pp - P)))
    d_pk = jnp.pad(d_pk, ((0, Pp - P), (0, 0)))
    w_p = jnp.pad(w, ((0, Pp - P), (0, ncp - NC)))
    b_p = jnp.pad(b, ((0, ncp - NC),)).reshape(1, ncp)

    grid = (Bp // tb, Pp // tp)

    logits_p, dv_p = pl.pallas_call(
        attack_dict_kernel,
        out_shape=(
            jax.ShapeDtypeStruct((Bp, ncp), jnp.float32),
            jax.ShapeDtypeStruct((Bp, Pp), jnp.float32),
        ),
        grid=grid,
        in_specs=[
            pl.BlockSpec((tb, K), lambda bi, pi: (bi, 0)),     # v[index] codes
            pl.BlockSpec((tp, K), lambda bi, pi: (pi, 0)),     # dictionary slice
            pl.BlockSpec((tb, tp), lambda bi, pi: (bi, pi)),   # x slab
            pl.BlockSpec((tp, ncp), lambda bi, pi: (pi, 0)),   # classifier weights
            pl.BlockSpec((1, ncp), lambda bi, pi: (0, 0)),     # bias
        ],
        out_specs=(
            pl.BlockSpec((tb, ncp), lambda bi, pi: (bi, 0)),   # resident accumulator
            pl.BlockSpec((tb, tp), lambda bi, pi: (bi, pi)),   # dv tile
        ),
        compiler_params=pltpu.CompilerParams(
            dimension_semantics=("parallel", "arbitrary")),
    )(v_sel, d_pk, x_flat, w_p, b_p)

    logits = logits_p[:B, :NC]
    dv = dv_p[:B, :P].reshape(B, C, H, W)
    return logits, dv


if __name__ == "__main__":
    # Small deterministic shapes consistent with the module:
    #   d : (C, H, W, K) dictionary of K perturbation atoms
    #   v : (N, K)       per-sample sparse codes, indexed by `index`
    B, C, H, W = 2, 4, 16, 16
    K = 8          # number of dictionary atoms
    N = 16         # dataset size (rows of v)
    NC = 10        # classes of the synthetic downstream `model`
    P = C * H * W

    key = jax.random.PRNGKey(0)
    kx, kd, kv, kw, kb = jax.random.split(key, 5)

    x = jax.random.normal(kx, (B, C, H, W), dtype=jnp.float32)
    d = 0.1 * jax.random.normal(kd, (C, H, W, K), dtype=jnp.float32)
    v = jax.random.normal(kv, (N, K), dtype=jnp.float32)
    index = jnp.array([3, 7], dtype=jnp.int32)

    # Deterministic synthetic "model": flatten -> linear classifier.
    # TODO(synk): the PyTorch module takes an arbitrary `model`; only a linear head is
    # fused here. A different downstream model would stay in plain JAX after the kernel.
    w = 0.02 * jax.random.normal(kw, (P, NC), dtype=jnp.float32)
    b = 0.01 * jax.random.normal(kb, (NC,), dtype=jnp.float32)

    logits, dv = jax.jit(attack_dict_forward)(x, index, v, d, w, b)
    jax.block_until_ready((logits, dv))

    # Pure-JAX reference check (mirrors the PyTorch semantics exactly).
    dv_ref = jnp.tensordot(v[index, :], d, axes=([1], [3]))          # (B, C, H, W)
    logits_ref = (x + dv_ref).reshape(B, -1) @ w + b

    assert jnp.allclose(dv, dv_ref, atol=1e-5, rtol=1e-5)
    assert jnp.allclose(logits, logits_ref, atol=1e-4, rtol=1e-4)

    print("KERNEL_OK")
</pallas_src>

<mosaic_0001>
module attributes {stable_mosaic.version = 11 : i64} {
  func.func @attack_dict_kernel(%arg0: i32, %arg1: i32, %arg2: memref<8x8xf32, #tpu.memory_space<vmem>>, %arg3: memref<1024x8xf32, #tpu.memory_space<vmem>>, %arg4: memref<8x1024xf32, #tpu.memory_space<vmem>>, %arg5: memref<1024x128xf32, #tpu.memory_space<vmem>>, %arg6: memref<1x128xf32, #tpu.memory_space<vmem>>, %arg7: memref<8x128xf32, #tpu.memory_space<vmem>>, %arg8: memref<8x1024xf32, #tpu.memory_space<vmem>>) attributes {dimension_semantics = [#tpu.dimension_semantics<parallel>, #tpu.dimension_semantics<arbitrary>], iteration_bounds = array<i64: 1, 1>, scalar_prefetch = 0 : i64, scratch_operands = 0 : i64, tpu.core_type = #tpu.core_type<tc>, window_params = [{transform_indices = @transform_0, window_bounds = array<i64: 8, 8>}, {transform_indices = @transform_1, window_bounds = array<i64: 1024, 8>}, {transform_indices = @transform_2, window_bounds = array<i64: 8, 1024>}, {transform_indices = @transform_3, window_bounds = array<i64: 1024, 128>}, {pipeline_mode = #tpu.pipeline_mode<synchronous>, transform_indices = @transform_4, window_bounds = array<i64: 1, 128>}, {transform_indices = @transform_5, window_bounds = array<i64: 8, 128>}, {transform_indices = @transform_6, window_bounds = array<i64: 8, 1024>}]} {
    %c0 = arith.constant 0 : index
    %c0_0 = arith.constant 0 : index
    %0 = vector.load %arg2[%c0, %c0_0] : memref<8x8xf32, #tpu.memory_space<vmem>>, vector<8x8xf32>
    %c0_1 = arith.constant 0 : index
    %c0_2 = arith.constant 0 : index
    %1 = vector.load %arg3[%c0_1, %c0_2] : memref<1024x8xf32, #tpu.memory_space<vmem>>, vector<1024x8xf32>
    %cst = arith.constant dense<0.000000e+00> : vector<8x1024xf32>
    %2 = tpu.matmul %0, %1, %cst {dimension_numbers = #tpu.dot_dimension_numbers<[1], [1], [0], [0], [0, 0, 1, 0], [], []>} : vector<8x8xf32>, vector<1024x8xf32>, vector<8x1024xf32> -> vector<8x1024xf32>
    %c0_3 = arith.constant 0 : index
    %c0_4 = arith.constant 0 : index
    %3 = vector.load %arg8[%c0_3, %c0_4] : memref<8x1024xf32, #tpu.memory_space<vmem>>, vector<8x1024xf32>
    tpu.vector_store %arg8[%c0_3, %c0_4], %2 {strides = array<i32>} : memref<8x1024xf32, #tpu.memory_space<vmem>>, vector<8x1024xf32>,
    %c0_5 = arith.constant 0 : index
    %c0_6 = arith.constant 0 : index
    %4 = vector.load %arg4[%c0_5, %c0_6] : memref<8x1024xf32, #tpu.memory_space<vmem>>, vector<8x1024xf32>
    %5 = arith.addf %4, %2 : vector<8x1024xf32>
    %c0_i32 = arith.constant 0 : i32
    %6 = arith.cmpi eq, %arg1, %c0_i32 : i32
    %7 = arith.extui %6 : i1 to i32
    %c0_i32_7 = arith.constant 0 : i32
    %8 = arith.cmpi ne, %7, %c0_i32_7 : i32
    scf.if %8 {
      %c0_15 = arith.constant 0 : index
      %c0_16 = arith.constant 0 : index
      %14 = vector.load %arg6[%c0_15, %c0_16] : memref<1x128xf32, #tpu.memory_space<vmem>>, vector<1x128xf32>
      %15 = vector.shape_cast %14 : vector<1x128xf32> to vector<1x128xf32>
      %16 = vector.broadcast %15 : vector<1x128xf32> to vector<8x128xf32>
      %c0_17 = arith.constant 0 : index
      %c0_18 = arith.constant 0 : index
      %17 = vector.load %arg7[%c0_17, %c0_18] : memref<8x128xf32, #tpu.memory_space<vmem>>, vector<8x128xf32>
      tpu.vector_store %arg7[%c0_17, %c0_18], %16 {strides = array<i32>} : memref<8x128xf32, #tpu.memory_space<vmem>>, vector<8x128xf32>,
    } else {
    }
    %c0_8 = arith.constant 0 : index
    %c0_9 = arith.constant 0 : index
    %9 = vector.load %arg7[%c0_8, %c0_9] : memref<8x128xf32, #tpu.memory_space<vmem>>, vector<8x128xf32>
    %c0_10 = arith.constant 0 : index
    %c0_11 = arith.constant 0 : index
    %10 = vector.load %arg5[%c0_10, %c0_11] : memref<1024x128xf32, #tpu.memory_space<vmem>>, vector<1024x128xf32>
    %cst_12 = arith.constant dense<0.000000e+00> : vector<8x128xf32>
    %11 = tpu.matmul %5, %10, %cst_12 {dimension_numbers = #tpu.dot_dimension_numbers<[1], [0], [0], [1], [0, 0, 1, 1], [], []>} : vector<8x1024xf32>, vector<1024x128xf32>, vector<8x128xf32> -> vector<8x128xf32>
    %12 = arith.addf %9, %11 : vector<8x128xf32>
    %c0_13 = arith.constant 0 : index
    %c0_14 = arith.constant 0 : index
    %13 = vector.load %arg7[%c0_13, %c0_14] : memref<8x128xf32, #tpu.memory_space<vmem>>, vector<8x128xf32>
    tpu.vector_store %arg7[%c0_13, %c0_14], %12 {strides = array<i32>} : memref<8x128xf32, #tpu.memory_space<vmem>>, vector<8x128xf32>,
    return
  }
  func.func @transform_0(%arg0: i32, %arg1: i32) -> (i32, i32) {
    %c0_i32 = arith.constant 0 : i32
    %c0_i32_0 = arith.constant 0 : i32
    return %arg0, %c0_i32 : i32, i32
  }
  func.func @transform_1(%arg0: i32, %arg1: i32) -> (i32, i32) {
    %c0_i32 = arith.constant 0 : i32
    %c0_i32_0 = arith.constant 0 : i32
    return %arg1, %c0_i32 : i32, i32
  }
  func.func @transform_2(%arg0: i32, %arg1: i32) -> (i32, i32) {
    %c0_i32 = arith.constant 0 : i32
    return %arg0, %arg1 : i32, i32
  }
  func.func @transform_3(%arg0: i32, %arg1: i32) -> (i32, i32) {
    %c0_i32 = arith.constant 0 : i32
    %c0_i32_0 = arith.constant 0 : i32
    return %arg1, %c0_i32 : i32, i32
  }
  func.func @transform_4(%arg0: i32, %arg1: i32) -> (i32, i32) {
    %c0_i32 = arith.constant 0 : i32
    %c0_i32_0 = arith.constant 0 : i32
    %c0_i32_1 = arith.constant 0 : i32
    return %c0_i32, %c0_i32_0 : i32, i32
  }
  func.func @transform_5(%arg0: i32, %arg1: i32) -> (i32, i32) {
    %c0_i32 = arith.constant 0 : i32
    %c0_i32_0 = arith.constant 0 : i32
    return %arg0, %c0_i32 : i32, i32
  }
  func.func @transform_6(%arg0: i32, %arg1: i32) -> (i32, i32) {
    %c0_i32 = arith.constant 0 : i32
    return %arg0, %arg1 : i32, i32
  }
}

</mosaic_0001>

<llo_original>
// kernel: attack_dict_forward.1
$region0: #{attack_dict_forward.1}
  #allocation0 [shape = 'u32[]', space=smem, size = 0x4, offset = 0x4, fixed_abs, tag = 'smem constant byte address 0x4 - core index']
  #allocation1 [shape = 'u32[144,128]{1,0:T(1,128)}', space=vmem, size = 0x12000, scoped, tag = 'internal scratch']
  %s0 = inlined_call_operand.vmem [shape: f32[8,8], index: 0, kind: input, shape index: {}]
  %s1 = inlined_call_operand.vmem [shape: f32[1024,8], index: 1, kind: input, shape index: {}]
  %s2 = inlined_call_operand.vmem [shape: f32[8,1024], index: 2, kind: input, shape index: {}]
  %s3 = inlined_call_operand.vmem [shape: f32[1024,128], index: 3, kind: input, shape index: {}]
  %s4 = inlined_call_operand.vmem [shape: f32[1,128], index: 4, kind: input, shape index: {}]
  %s5 = inlined_call_operand.vmem [shape: f32[8,128], index: 5, kind: output, shape index: {0}]
  %s6 = inlined_call_operand.vmem [shape: f32[8,1024], index: 6, kind: output, shape index: {1}]
  %7 = xla_tuple %s5, %s6
  %s8 = sld [smem:[#allocation0]]
  $region42: #{attack_dict_forward.1} parent=0
    _
  %s10 = ssub.s32 1, %s8
  %s11 = scalar_select 0, %s10, %s8
  // Predicated region
  $region2: #{attack_dict_forward.1} parent=0 // pred_check
    _
  $region3: #{attack_dict_forward.1} parent=0 // pred_check_branch
    %13 = sbr.rel (0) target = $region5
  $region4: #{attack_dict_forward.1} parent=0 // pred_region
    _
  $region5: #{attack_dict_forward.1} parent=0 // pred_fallthru
    _
  // Predicated region
  $region6: #{attack_dict_forward.1} parent=0 // pred_check
    _
  $region7: #{attack_dict_forward.1} parent=0 // pred_check_branch
    %15 = sbr.rel (0) target = $region9
  $region8: #{attack_dict_forward.1} parent=0 // pred_region
    _
  $region9: #{attack_dict_forward.1} parent=0 // pred_fallthru
    _
  // Predicated region
  $region10: #{attack_dict_forward.1} parent=0 // pred_check
    _
  $region11: #{attack_dict_forward.1} parent=0 // pred_check_branch
    %17 = sbr.rel (0) target = $region13
  $region12: #{attack_dict_forward.1} parent=0 // pred_region
    _
  $region13: #{attack_dict_forward.1} parent=0 // pred_fallthru
    _
  // Predicated region
  $region14: #{attack_dict_forward.1} parent=0 // pred_check
    _
  $region15: #{attack_dict_forward.1} parent=0 // pred_check_branch
    %19 = sbr.rel (0) target = $region17
  $region16: #{attack_dict_forward.1} parent=0 // pred_region
    _
  $region17: #{attack_dict_forward.1} parent=0 // pred_fallthru
    _
  // Predicated region
  $region18: #{attack_dict_forward.1} parent=0 // pred_check
    _
  $region19: #{attack_dict_forward.1} parent=0 // pred_check_branch
    %21 = sbr.rel (0) target = $region21
  $region20: #{attack_dict_forward.1} parent=0 // pred_region
    _
  $region21: #{attack_dict_forward.1} parent=0 // pred_fallthru
    _
  %v22 = vld [vmem:[%s0] sm:$0xff]
  %v23 = vld [vmem:[%s1] sm:$0xff]
  %v24 = vld [vmem:[%s1 + $0x8] sm:$0xff]
  %v25 = vld [vmem:[%s1 + $0x10] sm:$0xff]
  %v26 = vld [vmem:[%s1 + $0x18] sm:$0xff]
  %v27 = vld [vmem:[%s1 + $0x20] sm:$0xff]
  %v28 = vld [vmem:[%s1 + $0x28] sm:$0xff]
  %v29 = vld [vmem:[%s1 + $0x30] sm:$0xff]
  %v30 = vld [vmem:[%s1 + $0x38] sm:$0xff]
  %v31 = vld [vmem:[%s1 + $0x40] sm:$0xff]
  %v32 = vld [vmem:[%s1 + $0x48] sm:$0xff]
  %v33 = vld [vmem:[%s1 + $0x50] sm:$0xff]
  %v34 = vld [vmem:[%s1 + $0x58] sm:$0xff]
  %v35 = vld [vmem:[%s1 + $0x60] sm:$0xff]
  %v36 = vld [vmem:[%s1 + $0x68] sm:$0xff]
  %v37 = vld [vmem:[%s1 + $0x70] sm:$0xff]
  %v38 = vld [vmem:[%s1 + $0x78] sm:$0xff]
  %v39 = vld [vmem:[%s1 + $0x80] sm:$0xff]
  %v40 = vld [vmem:[%s1 + $0x88] sm:$0xff]
  %v41 = vld [vmem:[%s1 + $0x90] sm:$0xff]
  %v42 = vld [vmem:[%s1 + $0x98] sm:$0xff]
  %v43 = vld [vmem:[%s1 + $0xa0] sm:$0xff]
  %v44 = vld [vmem:[%s1 + $0xa8] sm:$0xff]
  %v45 = vld [vmem:[%s1 + $0xb0] sm:$0xff]
  %v46 = vld [vmem:[%s1 + $0xb8] sm:$0xff]
  %v47 = vld [vmem:[%s1 + $0xc0] sm:$0xff]
  %v48 = vld [vmem:[%s1 + $0xc8] sm:$0xff]
  %v49 = vld [vmem:[%s1 + $0xd0] sm:$0xff]
  %v50 = vld [vmem:[%s1 + $0xd8] sm:$0xff]
  %v51 = vld [vmem:[%s1 + $0xe0] sm:$0xff]
  %v52 = vld [vmem:[%s1 + $0xe8] sm:$0xff]
  %v53 = vld [vmem:[%s1 + $0xf0] sm:$0xff]
  %v54 = vld [vmem:[%s1 + $0xf8] sm:$0xff]
  %v55 = vld [vmem:[%s1 + $0x100] sm:$0xff]
  %v56 = vld [vmem:[%s1 + $0x108] sm:$0xff]
  %v57 = vld [vmem:[%s1 + $0x110] sm:$0xff]
  %v58 = vld [vmem:[%s1 + $0x118] sm:$0xff]
  %v59 = vld [vmem:[%s1 + $0x120] sm:$0xff]
  %v60 = vld [vmem:[%s1 + $0x128] sm:$0xff]
  %v61 = vld [vmem:[%s1 + $0x130] sm:$0xff]
  %v62 = vld [vmem:[%s1 + $0x138] sm:$0xff]
  %v63 = vld [vmem:[%s1 + $0x140] sm:$0xff]
  %v64 = vld [vmem:[%s1 + $0x148] sm:$0xff]
  %v65 = vld [vmem:[%s1 + $0x150] sm:$0xff]
  %v66 = vld [vmem:[%s1 + $0x158] sm:$0xff]
  %v67 = vld [vmem:[%s1 + $0x160] sm:$0xff]
  %v68 = vld [vmem:[%s1 + $0x168] sm:$0xff]
  %v69 = vld [vmem:[%s1 + $0x170] sm:$0xff]
  %v70 = vld [vmem:[%s1 + $0x178] sm:$0xff]
  %v71 = vld [vmem:[%s1 + $0x180] sm:$0xff]
  %v72 = vld [vmem:[%s1 + $0x188] sm:$0xff]
  %v73 = vld [vmem:[%s1 + $0x190] sm:$0xff]
  %v74 = vld [vmem:[%s1 + $0x198] sm:$0xff]
  %v75 = vld [vmem:[%s1 + $0x1a0] sm:$0xff]
  %v76 = vld [vmem:[%s1 + $0x1a8] sm:$0xff]
  %v77 = vld [vmem:[%s1 + $0x1b0] sm:$0xff]
  %v78 = vld [vmem:[%s1 + $0x1b8] sm:$0xff]
  %v79 = vld [vmem:[%s1 + $0x1c0] sm:$0xff]
  %v80 = vld [vmem:[%s1 + $0x1c8] sm:$0xff]
  %v81 = vld [vmem:[%s1 + $0x1d0] sm:$0xff]
  %v82 = vld [vmem:[%s1 + $0x1d8] sm:$0xff]
  %v83 = vld [vmem:[%s1 + $0x1e0] sm:$0xff]
  %v84 = vld [vmem:[%s1 + $0x1e8] sm:$0xff]
  %v85 = vld [vmem:[%s1 + $0x1f0] sm:$0xff]
  %v86 = vld [vmem:[%s1 + $0x1f8] sm:$0xff]
  %v87 = vld [vmem:[%s1 + $0x200] sm:$0xff]
  %v88 = vld [vmem:[%s1 + $0x208] sm:$0xff]
  %v89 = vld [vmem:[%s1 + $0x210] sm:$0xff]
  %v90 = vld [vmem:[%s1 + $0x218] sm:$0xff]
  %v91 = vld [vmem:[%s1 + $0x220] sm:$0xff]
  %v92 = vld [vmem:[%s1 + $0x228] sm:$0xff]
  %v93 = vld [vmem:[%s1 + $0x230] sm:$0xff]
  %v94 = vld [vmem:[%s1 + $0x238] sm:$0xff]
  %v95 = vld [vmem:[%s1 + $0x240] sm:$0xff]
  %v96 = vld [vmem:[%s1 + $0x248] sm:$0xff]
  %v97 = vld [vmem:[%s1 + $0x250] sm:$0xff]
  %v98 = vld [vmem:[%s1 + $0x258] sm:$0xff]
  %v99 = vld [vmem:[%s1 + $0x260] sm:$0xff]
  %v100 = vld [vmem:[%s1 + $0x268] sm:$0xff]
  %v101 = vld [vmem:[%s1 + $0x270] sm:$0xff]
  %v102 = vld [vmem:[%s1 + $0x278] sm:$0xff]
  %v103 = vld [vmem:[%s1 + $0x280] sm:$0xff]
  %v104 = vld [vmem:[%s1 + $0x288] sm:$0xff]
  %v105 = vld [vmem:[%s1 + $0x290] sm:$0xff]
  %v106 = vld [vmem:[%s1 + $0x298] sm:$0xff]
  %v107 = vld [vmem:[%s1 + $0x2a0] sm:$0xff]
  %v108 = vld [vmem:[%s1 + $0x2a8] sm:$0xff]
  %v109 = vld [vmem:[%s1 + $0x2b0] sm:$0xff]
  %v110 = vld [vmem:[%s1 + $0x2b8] sm:$0xff]
  %v111 = vld [vmem:[%s1 + $0x2c0] sm:$0xff]
  %v112 = vld [vmem:[%s1 + $0x2c8] sm:$0xff]
  %v113 = vld [vmem:[%s1 + $0x2d0] sm:$0xff]
  %v114 = vld [vmem:[%s1 + $0x2d8] sm:$0xff]
  %v115 = vld [vmem:[%s1 + $0x2e0] sm:$0xff]
  %v116 = vld [vmem:[%s1 + $0x2e8] sm:$0xff]
  %v117 = vld [vmem:[%s1 + $0x2f0] sm:$0xff]
  %v118 = vld [vmem:[%s1 + $0x2f8] sm:$0xff]
  %v119 = vld [vmem:[%s1 + $0x300] sm:$0xff]
  %v120 = vld [vmem:[%s1 + $0x308] sm:$0xff]
  %v121 = vld [vmem:[%s1 + $0x310] sm:$0xff]
  %v122 = vld [vmem:[%s1 + $0x318] sm:$0xff]
  %v123 = vld [vmem:[%s1 + $0x320] sm:$0xff]
  %v124 = vld [vmem:[%s1 + $0x328] sm:$0xff]
  %v125 = vld [vmem:[%s1 + $0x330] sm:$0xff]
  %v126 = vld [vmem:[%s1 + $0x338] sm:$0xff]
  %v127 = vld [vmem:[%s1 + $0x340] sm:$0xff]
  %v128 = vld [vmem:[%s1 + $0x348] sm:$0xff]
  %v129 = vld [vmem:[%s1 + $0x350] sm:$0xff]
  %v130 = vld [vmem:[%s1 + $0x358] sm:$0xff]
  %v131 = vld [vmem:[%s1 + $0x360] sm:$0xff]
  %v132 = vld [vmem:[%s1 + $0x368] sm:$0xff]
  %v133 = vld [vmem:[%s1 + $0x370] sm:$0xff]
  %v134 = vld [vmem:[%s1 + $0x378] sm:$0xff]
  %v135 = vld [vmem:[%s1 + $0x380] sm:$0xff]
  %v136 = vld [vmem:[%s1 + $0x388] sm:$0xff]
  %v137 = vld [vmem:[%s1 + $0x390] sm:$0xff]
  %v138 = vld [vmem:[%s1 + $0x398] sm:$0xff]
  %v139 = vld [vmem:[%s1 + $0x3a0] sm:$0xff]
  %v140 = vld [vmem:[%s1 + $0x3a8] sm:$0xff]
  %v141 = vld [vmem:[%s1 + $0x3b0] sm:$0xff]
  %v142 = vld [vmem:[%s1 + $0x3b8] sm:$0xff]
  %v143 = vld [vmem:[%s1 + $0x3c0] sm:$0xff]
  %v144 = vld [vmem:[%s1 + $0x3c8] sm:$0xff]
  %v145 = vld [vmem:[%s1 + $0x3d0] sm:$0xff]
  %v146 = vld [vmem:[%s1 + $0x3d8] sm:$0xff]
  %v147 = vld [vmem:[%s1 + $0x3e0] sm:$0xff]
  %v148 = vld [vmem:[%s1 + $0x3e8] sm:$0xff]
  %v149 = vld [vmem:[%s1 + $0x3f0] sm:$0xff]
  %v150 = vld [vmem:[%s1 + $0x3f8] sm:$0xff]
  %vm151 = vcmask 64512
  %v153 = vsel %vm151, %v22, 0
  %v156 = vsel %vm151, %v23, 0
  %v159 = vsel %vm151, %v24, 0
  %v162 = vsel %vm151, %v25, 0
  %v165 = vsel %vm151, %v26, 0
  %v168 = vsel %vm151, %v27, 0
  %v171 = vsel %vm151, %v28, 0
  %v174 = vsel %vm151, %v29, 0
  %v177 = vsel %vm151, %v30, 0
  %v180 = vsel %vm151, %v31, 0
  %v183 = vsel %vm151, %v32, 0
  %v186 = vsel %vm151, %v33, 0
  %v189 = vsel %vm151, %v34, 0
  %v192 = vsel %vm151, %v35, 0
  %v195 = vsel %vm151, %v36, 0
  %v198 = vsel %vm151, %v37, 0
  %v201 = vsel %vm151, %v38, 0
  %v204 = vsel %vm151, %v39, 0
  %v207 = vsel %vm151, %v40, 0
  %v210 = vsel %vm151, %v41, 0
  %v213 = vsel %vm151, %v42, 0
  %v216 = vsel %vm151, %v43, 0
  %v219 = vsel %vm151, %v44, 0
  %v222 = vsel %vm151, %v45, 0
  %v225 = vsel %vm151, %v46, 0
  %v228 = vsel %vm151, %v47, 0
  %v231 = vsel %vm151, %v48, 0
  %v234 = vsel %vm151, %v49, 0
  %v237 = vsel %vm151, %v50, 0
  %v240 = vsel %vm151, %v51, 0
  %v243 = vsel %vm151, %v52, 0
  %v246 = vsel %vm151, %v53, 0
  %v249 = vsel %vm151, %v54, 0
  %v252 = vsel %vm151, %v55, 0
  %v255 = vsel %vm151, %v56, 0
  %v258 = vsel %vm151, %v57, 0
  %v261 = vsel %vm151, %v58, 0
  %v264 = vsel %vm151, %v59, 0
  %v267 = vsel %vm151, %v60, 0
  %v270 = vsel %vm151, %v61, 0
  %v273 = vsel %vm151, %v62, 0
  %v276 = vsel %vm151, %v63, 0
  %v279 = vsel %vm151, %v64, 0
  %v282 = vsel %vm151, %v65, 0
  %v285 = vsel %vm151, %v66, 0
  %v288 = vsel %vm151, %v67, 0
  %v291 = vsel %vm151, %v68, 0
  %v294 = vsel %vm151, %v69, 0
  %v297 = vsel %vm151, %v70, 0
  %v300 = vsel %vm151, %v71, 0
  %v303 = vsel %vm151, %v72, 0
  %v306 = vsel %vm151, %v73, 0
  %v309 = vsel %vm151, %v74, 0
  %v312 = vsel %vm151, %v75, 0
  %v315 = vsel %vm151, %v76, 0
  %v318 = vsel %vm151, %v77, 0
  %v321 = vsel %vm151, %v78, 0
  %v324 = vsel %vm151, %v79, 0
  %v327 = vsel %vm151, %v80, 0
  %v330 = vsel %vm151, %v81, 0
  %v333 = vsel %vm151, %v82, 0
  %v336 = vsel %vm151, %v83, 0
  %v339 = vsel %vm151, %v84, 0
  %v342 = vsel %vm151, %v85, 0
  %v345 = vsel %vm151, %v86, 0
  %v348 = vsel %vm151, %v87, 0
  %v351 = vsel %vm151, %v88, 0
  %v354 = vsel %vm151, %v89, 0
  %v357 = vsel %vm151, %v90, 0
  %v360 = vsel %vm151, %v91, 0
  %v363 = vsel %vm151, %v92, 0
  %v366 = vsel %vm151, %v93, 0
  %v369 = vsel %vm151, %v94, 0
  %v372 = vsel %vm151, %v95, 0
  %v375 = vsel %vm151, %v96, 0
  %v378 = vsel %vm151, %v97, 0
  %v381 = vsel %vm151, %v98, 0
  %v384 = vsel %vm151, %v99, 0
  %v387 = vsel %vm151, %v100, 0
  %v390 = vsel %vm151, %v101, 0
  %v393 = vsel %vm151, %v102, 0
  %v396 = vsel %vm151, %v103, 0
  %v399 = vsel %vm151, %v104, 0
  %v402 = vsel %vm151, %v105, 0
  %v405 = vsel %vm151, %v106, 0
  %v408 = vsel %vm151, %v107, 0
  %v411 = vsel %vm151, %v108, 0
  %v414 = vsel %vm151, %v109, 0
  %v417 = vsel %vm151, %v110, 0
  %v420 = vsel %vm151, %v111, 0
  %v423 = vsel %vm151, %v112, 0
  %v426 = vsel %vm151, %v113, 0
  %v429 = vsel %vm151, %v114, 0
  %v432 = vsel %vm151, %v115, 0
  %v435 = vsel %vm151, %v116, 0
  %v438 = vsel %vm151, %v117, 0
  %v441 = vsel %vm151, %v118, 0
  %v444 = vsel %vm151, %v119, 0
  %v447 = vsel %vm151, %v120, 0
  %v450 = vsel %vm151, %v121, 0
  %v453 = vsel %vm151, %v122, 0
  %v456 = vsel %vm151, %v123, 0
  %v459 = vsel %vm151, %v124, 0
  %v462 = vsel %vm151, %v125, 0
  %v465 = vsel %vm151, %v126, 0
  %v468 = vsel %vm151, %v127, 0
  %v471 = vsel %vm151, %v128, 0
  %v474 = vsel %vm151, %v129, 0
  %v477 = vsel %vm151, %v130, 0
  %v480 = vsel %vm151, %v131, 0
  %v483 = vsel %vm151, %v132, 0
  %v486 = vsel %vm151, %v133, 0
  %v489 = vsel %vm151, %v134, 0
  %v492 = vsel %vm151, %v135, 0
  %v495 = vsel %vm151, %v136, 0
  %v498 = vsel %vm151, %v137, 0
  %v501 = vsel %vm151, %v138, 0
  %v504 = vsel %vm151, %v139, 0
  %v507 = vsel %vm151, %v140, 0
  %v510 = vsel %vm151, %v141, 0
  %v513 = vsel %vm151, %v142, 0
  %v516 = vsel %vm151, %v143, 0
  %v519 = vsel %vm151, %v144, 0
  %v522 = vsel %vm151, %v145, 0
  %v525 = vsel %vm151, %v146, 0
  %v528 = vsel %vm151, %v147, 0
  %v531 = vsel %vm151, %v148, 0
  %v534 = vsel %vm151, %v149, 0
  %v537 = vsel %vm151, %v150, 0
  %539 = vmatprep.subr.mxu0 0.0
  %540 = vmatpush1.xpose.msra.mxu0 %v156
  %541 = vmatprep.subr.mxu0 0.0
  %542 = vmatpush1.xpose.msra.mxu0 %v159
  %543 = vmatprep.subr.mxu0 0.0
  %544 = vmatpush1.xpose.msra.mxu0 %v162
  %545 = vmatprep.subr.mxu0 0.0
  %546 = vmatpush1.xpose.msra.mxu0 %v165
  %547 = vmatprep.subr.mxu0 0.0
  %548 = vmatpush1.xpose.msra.mxu0 %v168
  %549 = vmatprep.subr.mxu0 0.0
  %550 = vmatpush1.xpose.msra.mxu0 %v171
  %551 = vmatprep.subr.mxu0 0.0
  %552 = vmatpush1.xpose.msra.mxu0 %v174
  %553 = vmatprep.subr.mxu0 0.0
  %554 = vmatpush1.xpose.msra.mxu0 %v177
  %555 = vmatprep.subr.mxu0 0.0
  %556 = vmatpush1.xpose.msra.mxu0 %v180
  %557 = vmatprep.subr.mxu0 0.0
  %558 = vmatpush1.xpose.msra.mxu0 %v183
  %559 = vmatprep.subr.mxu0 0.0
  %560 = vmatpush1.xpose.msra.mxu0 %v186
  %561 = vmatprep.subr.mxu0 0.0
  %562 = vmatpush1.xpose.msra.mxu0 %v189
  %563 = vmatprep.subr.mxu0 0.0
  %564 = vmatpush1.xpose.msra.mxu0 %v192
  %565 = vmatprep.subr.mxu0 0.0
  %566 = vmatpush1.xpose.msra.mxu0 %v195
  %567 = vmatprep.subr.mxu0 0.0
  %568 = vmatpush1.xpose.msra.mxu0 %v198
  %569 = vmatprep.subr.mxu0 0.0
  %570 = vmatpush1.xpose.msra.mxu0 %v201
  %571 = vmatprep.subr.mxu0 0.0
  %572 = vmatpush1.xpose.msra.mxu0 %v204
  %573 = vmatprep.subr.mxu0 0.0
  %574 = vmatpush1.xpose.msra.mxu0 %v207
  %575 = vmatprep.subr.mxu0 0.0
  %576 = vmatpush1.xpose.msra.mxu0 %v210
  %577 = vmatprep.subr.mxu0 0.0
  %578 = vmatpush1.xpose.msra.mxu0 %v213
  %579 = vmatprep.subr.mxu0 0.0
  %580 = vmatpush1.xpose.msra.mxu0 %v216
  %581 = vmatprep.subr.mxu0 0.0
  %582 = vmatpush1.xpose.msra.mxu0 %v219
  %583 = vmatprep.subr.mxu0 0.0
  %584 = vmatpush1.xpose.msra.mxu0 %v222
  %585 = vmatprep.subr.mxu0 0.0
  %586 = vmatpush1.xpose.msra.mxu0 %v225
  %587 = vmatprep.subr.mxu0 0.0
  %588 = vmatpush1.xpose.msra.mxu0 %v228
  %589 = vmatprep.subr.mxu0 0.0
  %590 = vmatpush1.xpose.msra.mxu0 %v231
  %591 = vmatprep.subr.mxu0 0.0
  %592 = vmatpush1.xpose.msra.mxu0 %v234
  %593 = vmatprep.subr.mxu0 0.0
  %594 = vmatpush1.xpose.msra.mxu0 %v237
  %595 = vmatprep.subr.mxu0 0.0
  %596 = vmatpush1.xpose.msra.mxu0 %v240
  %597 = vmatprep.subr.mxu0 0.0
  %598 = vmatpush1.xpose.msra.mxu0 %v243
  %599 = vmatprep.subr.mxu0 0.0
  %600 = vmatpush1.xpose.msra.mxu0 %v246
  %601 = vmatprep.subr.mxu0 0.0
  %602 = vmatpush1.xpose.msra.mxu0 %v249
  %603 = vmatprep.mubr.f32.mxu0 0.0
  %604 = vmatmul.mubr.f32.gmra.mrb[0].mxu0 %v153
  %v605 = vpop.f32.mrb[0].mxu0
  %v606 = vadd.f32 0.0, %v605
  %v607 = vpop.f32.mrb[0].mxu0
  %v608 = vadd.f32 0.0, %v607
  %609 = vdwg.mxu0
  %610 = vmatprep.subr.mxu0 0.0
  %611 = vmatpush1.xpose.msra.mxu0 %v252
  %612 = vmatprep.subr.mxu0 0.0
  %613 = vmatpush1.xpose.msra.mxu0 %v255
  %614 = vmatprep.subr.mxu0 0.0
  %615 = vmatpush1.xpose.msra.mxu0 %v258
  %616 = vmatprep.subr.mxu0 0.0
  %617 = vmatpush1.xpose.msra.mxu0 %v261
  %618 = vmatprep.subr.mxu0 0.0
  %619 = vmatpush1.xpose.msra.mxu0 %v264
  %620 = vmatprep.subr.mxu0 0.0
  %621 = vmatpush1.xpose.msra.mxu0 %v267
  %622 = vmatprep.subr.mxu0 0.0
  %623 = vmatpush1.xpose.msra.mxu0 %v270
  %624 = vmatprep.subr.mxu0 0.0
  %625 = vmatpush1.xpose.msra.mxu0 %v273
  %626 = vmatprep.subr.mxu0 0.0
  %627 = vmatpush1.xpose.msra.mxu0 %v276
  %628 = vmatprep.subr.mxu0 0.0
  %629 = vmatpush1.xpose.msra.mxu0 %v279
  %630 = vmatprep.subr.mxu0 0.0
  %631 = vmatpush1.xpose.msra.mxu0 %v282
  %632 = vmatprep.subr.mxu0 0.0
  %633 = vmatpush1.xpose.msra.mxu0 %v285
  %634 = vmatprep.subr.mxu0 0.0
  %635 = vmatpush1.xpose.msra.mxu0 %v288
  %636 = vmatprep.subr.mxu0 0.0
  %637 = vmatpush1.xpose.msra.mxu0 %v291
  %638 = vmatprep.subr.mxu0 0.0
  %639 = vmatpush1.xpose.msra.mxu0 %v294
  %640 = vmatprep.subr.mxu0 0.0
  %641 = vmatpush1.xpose.msra.mxu0 %v297
  %642 = vmatprep.subr.mxu0 0.0
  %643 = vmatpush1.xpose.msra.mxu0 %v300
  %644 = vmatprep.subr.mxu0 0.0
  %645 = vmatpush1.xpose.msra.mxu0 %v303
  %646 = vmatprep.subr.mxu0 0.0
  %647 = vmatpush1.xpose.msra.mxu0 %v306
  %648 = vmatprep.subr.mxu0 0.0
  %649 = vmatpush1.xpose.msra.mxu0 %v309
  %650 = vmatprep.subr.mxu0 0.0
  %651 = vmatpush1.xpose.msra.mxu0 %v312
  %652 = vmatprep.subr.mxu0 0.0
  %653 = vmatpush1.xpose.msra.mxu0 %v315
  %654 = vmatprep.subr.mxu0 0.0
  %655 = vmatpush1.xpose.msra.mxu0 %v318
  %656 = vmatprep.subr.mxu0 0.0
  %657 = vmatpush1.xpose.msra.mxu0 %v321
  %658 = vmatprep.subr.mxu0 0.0
  %659 = vmatpush1.xpose.msra.mxu0 %v324
  %660 = vmatprep.subr.mxu0 0.0
  %661 = vmatpush1.xpose.msra.mxu0 %v327
  %662 = vmatprep.subr.mxu0 0.0
  %663 = vmatpush1.xpose.msra.mxu0 %v330
  %664 = vmatprep.subr.mxu0 0.0
  %665 = vmatpush1.xpose.msra.mxu0 %v333
  %666 = vmatprep.subr.mxu0 0.0
  %667 = vmatpush1.xpose.msra.mxu0 %v336
  %668 = vmatprep.subr.mxu0 0.0
  %669 = vmatpush1.xpose.msra.mxu0 %v339
  %670 = vmatprep.subr.mxu0 0.0
  %671 = vmatpush1.xpose.msra.mxu0 %v342
  %672 = vmatprep.subr.mxu0 0.0
  %673 = vmatpush1.xpose.msra.mxu0 %v345
  %674 = vmatprep.mubr.f32.mxu0 0.0
  %675 = vmatmul.mubr.f32.gmra.mrb[0].mxu0 %v153
  %v676 = vpop.f32.mrb[0].mxu0
  %v677 = vadd.f32 0.0, %v676
  %v678 = vpop.f32.mrb[0].mxu0
  %v679 = vadd.f32 0.0, %v678
  %680 = vdwg.mxu0
  %681 = vmatprep.subr.mxu0 0.0
  %682 = vmatpush1.xpose.msra.mxu0 %v348
  %683 = vmatprep.subr.mxu0 0.0
  %684 = vmatpush1.xpose.msra.mxu0 %v351
  %685 = vmatprep.subr.mxu0 0.0
  %686 = vmatpush1.xpose.msra.mxu0 %v354
  %687 = vmatprep.subr.mxu0 0.0
  %688 = vmatpush1.xpose.msra.mxu0 %v357
  %689 = vmatprep.subr.mxu0 0.0
  %690 = vmatpush1.xpose.msra.mxu0 %v360
  %691 = vmatprep.subr.mxu0 0.0
  %692 = vmatpush1.xpose.msra.mxu0 %v363
  %693 = vmatprep.subr.mxu0 0.0
  %694 = vmatpush1.xpose.msra.mxu0 %v366
  %695 = vmatprep.subr.mxu0 0.0
  %696 = vmatpush1.xpose.msra.mxu0 %v369
  %697 = vmatprep.subr.mxu0 0.0
  %698 = vmatpush1.xpose.msra.mxu0 %v372
  %699 = vmatprep.subr.mxu0 0.0
  %700 = vmatpush1.xpose.msra.mxu0 %v375
  %701 = vmatprep.subr.mxu0 0.0
  %702 = vmatpush1.xpose.msra.mxu0 %v378
  %703 = vmatprep.subr.mxu0 0.0
  %704 = vmatpush1.xpose.msra.mxu0 %v381
  %705 = vmatprep.subr.mxu0 0.0
  %706 = vmatpush1.xpose.msra.mxu0 %v384
  %707 = vmatprep.subr.mxu0 0.0
  %708 = vmatpush1.xpose.msra.mxu0 %v387
  %709 = vmatprep.subr.mxu0 0.0
  %710 = vmatpush1.xpose.msra.mxu0 %v390
  %711 = vmatprep.subr.mxu0 0.0
  %712 = vmatpush1.xpose.msra.mxu0 %v393
  %713 = vmatprep.subr.mxu0 0.0
  %714 = vmatpush1.xpose.msra.mxu0 %v396
  %715 = vmatprep.subr.mxu0 0.0
  %716 = vmatpush1.xpose.msra.mxu0 %v399
  %717 = vmatprep.subr.mxu0 0.0
  %718 = vmatpush1.xpose.msra.mxu0 %v402
  %719 = vmatprep.subr.mxu0 0.0
  %720 = vmatpush1.xpose.msra.mxu0 %v405
  %721 = vmatprep.subr.mxu0 0.0
  %722 = vmatpush1.xpose.msra.mxu0 %v408
  %723 = vmatprep.subr.mxu0 0.0
  %724 = vmatpush1.xpose.msra.mxu0 %v411
  %725 = vmatprep.subr.mxu0 0.0
  %726 = vmatpush1.xpose.msra.mxu0 %v414
  %727 = vmatprep.subr.mxu0 0.0
  %728 = vmatpush1.xpose.msra.mxu0 %v417
  %729 = vmatprep.subr.mxu0 0.0
  %730 = vmatpush1.xpose.msra.mxu0 %v420
  %731 = vmatprep.subr.mxu0 0.0
  %732 = vmatpush1.xpose.msra.mxu0 %v423
  %733 = vmatprep.subr.mxu0 0.0
  %734 = vmatpush1.xpose.msra.mxu0 %v426
  %735 = vmatprep.subr.mxu0 0.0
  %736 = vmatpush1.xpose.msra.mxu0 %v429
  %737 = vmatprep.subr.mxu0 0.0
  %738 = vmatpush1.xpose.msra.mxu0 %v432
  %739 = vmatprep.subr.mxu0 0.0
  %740 = vmatpush1.xpose.msra.mxu0 %v435
  %741 = vmatprep.subr.mxu0 0.0
  %742 = vmatpush1.xpose.msra.mxu0 %v438
  %743 = vmatprep.subr.mxu0 0.0
  %744 = vmatpush1.xpose.msra.mxu0 %v441
  %745 = vmatprep.mubr.f32.mxu0 0.0
  %746 = vmatmul.mubr.f32.gmra.mrb[0].mxu0 %v153
  %v747 = vpop.f32.mrb[0].mxu0
  %v748 = vadd.f32 0.0, %v747
  %v749 = vpop.f32.mrb[0].mxu0
  %v750 = vadd.f32 0.0, %v749
  %751 = vdwg.mxu0
  %752 = vmatprep.subr.mxu0 0.0
  %753 = vmatpush1.xpose.msra.mxu0 %v444
  %754 = vmatprep.subr.mxu0 0.0
  %755 = vmatpush1.xpose.msra.mxu0 %v447
  %756 = vmatprep.subr.mxu0 0.0
  %757 = vmatpush1.xpose.msra.mxu0 %v450
  %758 = vmatprep.subr.mxu0 0.0
  %759 = vmatpush1.xpose.msra.mxu0 %v453
  %760 = vmatprep.subr.mxu0 0.0
  %761 = vmatpush1.xpose.msra.mxu0 %v456
  %762 = vmatprep.subr.mxu0 0.0
  %763 = vmatpush1.xpose.msra.mxu0 %v459
  %764 = vmatprep.subr.mxu0 0.0
  %765 = vmatpush1.xpose.msra.mxu0 %v462
  %766 = vmatprep.subr.mxu0 0.0
  %767 = vmatpush1.xpose.msra.mxu0 %v465
  %768 = vmatprep.subr.mxu0 0.0
  %769 = vmatpush1.xpose.msra.mxu0 %v468
  %770 = vmatprep.subr.mxu0 0.0
  %771 = vmatpush1.xpose.msra.mxu0 %v471
  %772 = vmatprep.subr.mxu0 0.0
  %773 = vmatpush1.xpose.msra.mxu0 %v474
  %774 = vmatprep.subr.mxu0 0.0
  %775 = vmatpush1.xpose.msra.mxu0 %v477
  %776 = vmatprep.subr.mxu0 0.0
  %777 = vmatpush1.xpose.msra.mxu0 %v480
  %778 = vmatprep.subr.mxu0 0.0
  %779 = vmatpush1.xpose.msra.mxu0 %v483
  %780 = vmatprep.subr.mxu0 0.0
  %781 = vmatpush1.xpose.msra.mxu0 %v486
  %782 = vmatprep.subr.mxu0 0.0
  %783 = vmatpush1.xpose.msra.mxu0 %v489
  %784 = vmatprep.subr.mxu0 0.0
  %785 = vmatpush1.xpose.msra.mxu0 %v492
  %786 = vmatprep.subr.mxu0 0.0
  %787 = vmatpush1.xpose.msra.mxu0 %v495
  %788 = vmatprep.subr.mxu0 0.0
  %789 = vmatpush1.xpose.msra.mxu0 %v498
  %790 = vmatprep.subr.mxu0 0.0
  %791 = vmatpush1.xpose.msra.mxu0 %v501
  %792 = vmatprep.subr.mxu0 0.0
  %793 = vmatpush1.xpose.msra.mxu0 %v504
  %794 = vmatprep.subr.mxu0 0.0
  %795 = vmatpush1.xpose.msra.mxu0 %v507
  %796 = vmatprep.subr.mxu0 0.0
  %797 = vmatpush1.xpose.msra.mxu0 %v510
  %798 = vmatprep.subr.mxu0 0.0
  %799 = vmatpush1.xpose.msra.mxu0 %v513
  %800 = vmatprep.subr.mxu0 0.0
  %801 = vmatpush1.xpose.msra.mxu0 %v516
  %802 = vmatprep.subr.mxu0 0.0
  %803 = vmatpush1.xpose.msra.mxu0 %v519
  %804 = vmatprep.subr.mxu0 0.0
  %805 = vmatpush1.xpose.msra.mxu0 %v522
  %806 = vmatprep.subr.mxu0 0.0
  %807 = vmatpush1.xpose.msra.mxu0 %v525
  %808 = vmatprep.subr.mxu0 0.0
  %809 = vmatpush1.xpose.msra.mxu0 %v528
  %810 = vmatprep.subr.mxu0 0.0
  %811 = vmatpush1.xpose.msra.mxu0 %v531
  %812 = vmatprep.subr.mxu0 0.0
  %813 = vmatpush1.xpose.msra.mxu0 %v534
  %814 = vmatprep.subr.mxu0 0.0
  %815 = vmatpush1.xpose.msra.mxu0 %v537
  %816 = vmatprep.mubr.f32.mxu0 0.0
  %817 = vmatmul.mubr.f32.gmra.mrb[0].mxu0 %v153
  %v818 = vpop.f32.mrb[0].mxu0
  %v819 = vadd.f32 0.0, %v818
  %v820 = vpop.f32.mrb[0].mxu0
  %v821 = vadd.f32 0.0, %v820
  %822 = vdwg.mxu0
  %823 = vst [vmem:[%s6] sm:$0xff] %v606
  %824 = vst [vmem:[%s6 + $0x8] sm:$0xff] %v608
  %825 = vst [vmem:[%s6 + $0x10] sm:$0xff] %v677
  %826 = vst [vmem:[%s6 + $0x18] sm:$0xff] %v679
  %827 = vst [vmem:[%s6 + $0x20] sm:$0xff] %v748
  %828 = vst [vmem:[%s6 + $0x28] sm:$0xff] %v750
  %829 = vst [vmem:[%s6 + $0x30] sm:$0xff] %v819
  %830 = vst [vmem:[%s6 + $0x38] sm:$0xff] %v821
  %v831 = vld [vmem:[%s2] sm:$0xff]
  %v832 = vld [vmem:[%s2 + $0x8] sm:$0xff]
  %v833 = vld [vmem:[%s2 + $0x10] sm:$0xff]
  %v834 = vld [vmem:[%s2 + $0x18] sm:$0xff]
  %v835 = vld [vmem:[%s2 + $0x20] sm:$0xff]
  %v836 = vld [vmem:[%s2 + $0x28] sm:$0xff]
  %v837 = vld [vmem:[%s2 + $0x30] sm:$0xff]
  %v838 = vld [vmem:[%s2 + $0x38] sm:$0xff]
  %v839 = vadd.f32 %v831, %v606
  %v840 = vadd.f32 %v832, %v608
  %v841 = vadd.f32 %v833, %v677
  %v842 = vadd.f32 %v834, %v679
  %v843 = vadd.f32 %v835, %v748
  %v844 = vadd.f32 %v836, %v750
  %v845 = vadd.f32 %v837, %v819
  %v846 = vadd.f32 %v838, %v821
  %p847 = scmp.eq.s32.totalorder 0, 0
  // Predicated region
  $region22: #{attack_dict_forward.1} parent=0 // pred_check
    %p848 = pneg %p847
  $region23: #{attack_dict_forward.1} parent=0 // pred_check_branch
    %850 = sbr.rel (%p848) target = $region25
  $region24: #{attack_dict_forward.1} parent=0 // pred_region
    %v851 = vld [vmem:[%s4] sm:$0x1]
    %v853 = vlaneseq
    %v854 = vshrl.u32 %v853, 7
    %v855 = vsub.s32 0, %v854
    %v856 = vrot.slane %v851, %v855
    %858 = vst [vmem:[%s5] sm:$0xff] %v856
  $region25: #{attack_dict_forward.1} parent=0 // pred_fallthru
    _
  %v859 = vld [vmem:[%s5] sm:$0xff]
  %v860 = vld [vmem:[%s3] sm:$0xff]
  %v861 = vld [vmem:[%s3 + $0x8] sm:$0xff]
  %v862 = vld [vmem:[%s3 + $0x10] sm:$0xff]
  %v863 = vld [vmem:[%s3 + $0x18] sm:$0xff]
  %v864 = vld [vmem:[%s3 + $0x20] sm:$0xff]
  %v865 = vld [vmem:[%s3 + $0x28] sm:$0xff]
  %v866 = vld [vmem:[%s3 + $0x30] sm:$0xff]
  %v867 = vld [vmem:[%s3 + $0x38] sm:$0xff]
  %v868 = vld [vmem:[%s3 + $0x40] sm:$0xff]
  %v869 = vld [vmem:[%s3 + $0x48] sm:$0xff]
  %v870 = vld [vmem:[%s3 + $0x50] sm:$0xff]
  %v871 = vld [vmem:[%s3 + $0x58] sm:$0xff]
  %v872 = vld [vmem:[%s3 + $0x60] sm:$0xff]
  %v873 = vld [vmem:[%s3 + $0x68] sm:$0xff]
  %v874 = vld [vmem:[%s3 + $0x70] sm:$0xff]
  %v875 = vld [vmem:[%s3 + $0x78] sm:$0xff]
  %v876 = vld [vmem:[%s3 + $0x80] sm:$0xff]
  %v877 = vld [vmem:[%s3 + $0x88] sm:$0xff]
  %v878 = vld [vmem:[%s3 + $0x90] sm:$0xff]
  %v879 = vld [vmem:[%s3 + $0x98] sm:$0xff]
  %v880 = vld [vmem:[%s3 + $0xa0] sm:$0xff]
  %v881 = vld [vmem:[%s3 + $0xa8] sm:$0xff]
  %v882 = vld [vmem:[%s3 + $0xb0] sm:$0xff]
  %v883 = vld [vmem:[%s3 + $0xb8] sm:$0xff]
  %v884 = vld [vmem:[%s3 + $0xc0] sm:$0xff]
  %v885 = vld [vmem:[%s3 + $0xc8] sm:$0xff]
  %v886 = vld [vmem:[%s3 + $0xd0] sm:$0xff]
  %v887 = vld [vmem:[%s3 + $0xd8] sm:$0xff]
  %v888 = vld [vmem:[%s3 + $0xe0] sm:$0xff]
  %v889 = vld [vmem:[%s3 + $0xe8] sm:$0xff]
  %v890 = vld [vmem:[%s3 + $0xf0] sm:$0xff]
  %v891 = vld [vmem:[%s3 + $0xf8] sm:$0xff]
  %v892 = vld [vmem:[%s3 + $0x100] sm:$0xff]
  %v893 = vld [vmem:[%s3 + $0x108] sm:$0xff]
  %v894 = vld [vmem:[%s3 + $0x110] sm:$0xff]
  %v895 = vld [vmem:[%s3 + $0x118] sm:$0xff]
  %v896 = vld [vmem:[%s3 + $0x120] sm:$0xff]
  %v897 = vld [vmem:[%s3 + $0x128] sm:$0xff]
  %v898 = vld [vmem:[%s3 + $0x130] sm:$0xff]
  %v899 = vld [vmem:[%s3 + $0x138] sm:$0xff]
  %v900 = vld [vmem:[%s3 + $0x140] sm:$0xff]
  %v901 = vld [vmem:[%s3 + $0x148] sm:$0xff]
  %v902 = vld [vmem:[%s3 + $0x150] sm:$0xff]
  %v903 = vld [vmem:[%s3 + $0x158] sm:$0xff]
  %v904 = vld [vmem:[%s3 + $0x160] sm:$0xff]
  %v905 = vld [vmem:[%s3 + $0x168] sm:$0xff]
  %v906 = vld [vmem:[%s3 + $0x170] sm:$0xff]
  %v907 = vld [vmem:[%s3 + $0x178] sm:$0xff]
  %v908 = vld [vmem:[%s3 + $0x180] sm:$0xff]
  %v909 = vld [vmem:[%s3 + $0x188] sm:$0xff]
  %v910 = vld [vmem:[%s3 + $0x190] sm:$0xff]
  %v911 = vld [vmem:[%s3 + $0x198] sm:$0xff]
  %v912 = vld [vmem:[%s3 + $0x1a0] sm:$0xff]
  %v913 = vld [vmem:[%s3 + $0x1a8] sm:$0xff]
  %v914 = vld [vmem:[%s3 + $0x1b0] sm:$0xff]
  %v915 = vld [vmem:[%s3 + $0x1b8] sm:$0xff]
  %v916 = vld [vmem:[%s3 + $0x1c0] sm:$0xff]
  %v917 = vld [vmem:[%s3 + $0x1c8] sm:$0xff]
  %v918 = vld [vmem:[%s3 + $0x1d0] sm:$0xff]
  %v919 = vld [vmem:[%s3 + $0x1d8] sm:$0xff]
  %v920 = vld [vmem:[%s3 + $0x1e0] sm:$0xff]
  %v921 = vld [vmem:[%s3 + $0x1e8] sm:$0xff]
  %v922 = vld [vmem:[%s3 + $0x1f0] sm:$0xff]
  %v923 = vld [vmem:[%s3 + $0x1f8] sm:$0xff]
  %v924 = vld [vmem:[%s3 + $0x200] sm:$0xff]
  %v925 = vld [vmem:[%s3 + $0x208] sm:$0xff]
  %v926 = vld [vmem:[%s3 + $0x210] sm:$0xff]
  %v927 = vld [vmem:[%s3 + $0x218] sm:$0xff]
  %v928 = vld [vmem:[%s3 + $0x220] sm:$0xff]
  %v929 = vld [vmem:[%s3 + $0x228] sm:$0xff]
  %v930 = vld [vmem:[%s3 + $0x230] sm:$0xff]
  %v931 = vld [vmem:[%s3 + $0x238] sm:$0xff]
  %v932 = vld [vmem:[%s3 + $0x240] sm:$0xff]
  %v933 = vld [vmem:[%s3 + $0x248] sm:$0xff]
  %v934 = vld [vmem:[%s3 + $0x250] sm:$0xff]
  %v935 = vld [vmem:[%s3 + $0x258] sm:$0xff]
  %v936 = vld [vmem:[%s3 + $0x260] sm:$0xff]
  %v937 = vld [vmem:[%s3 + $0x268] sm:$0xff]
  %v938 = vld [vmem:[%s3 + $0x270] sm:$0xff]
  %v939 = vld [vmem:[%s3 + $0x278] sm:$0xff]
  %v940 = vld [vmem:[%s3 + $0x280] sm:$0xff]
  %v941 = vld [vmem:[%s3 + $0x288] sm:$0xff]
  %v942 = vld [vmem:[%s3 + $0x290] sm:$0xff]
  %v943 = vld [vmem:[%s3 + $0x298] sm:$0xff]
  %v944 = vld [vmem:[%s3 + $0x2a0] sm:$0xff]
  %v945 = vld [vmem:[%s3 + $0x2a8] sm:$0xff]
  %v946 = vld [vmem:[%s3 + $0x2b0] sm:$0xff]
  %v947 = vld [vmem:[%s3 + $0x2b8] sm:$0xff]
  %v948 = vld [vmem:[%s3 + $0x2c0] sm:$0xff]
  %v949 = vld [vmem:[%s3 + $0x2c8] sm:$0xff]
  %v950 = vld [vmem:[%s3 + $0x2d0] sm:$0xff]
  %v951 = vld [vmem:[%s3 + $0x2d8] sm:$0xff]
  %v952 = vld [vmem:[%s3 + $0x2e0] sm:$0xff]
  %v953 = vld [vmem:[%s3 + $0x2e8] sm:$0xff]
  %v954 = vld [vmem:[%s3 + $0x2f0] sm:$0xff]
  %v955 = vld [vmem:[%s3 + $0x2f8] sm:$0xff]
  %v956 = vld [vmem:[%s3 + $0x300] sm:$0xff]
  %v957 = vld [vmem:[%s3 + $0x308] sm:$0xff]
  %v958 = vld [vmem:[%s3 + $0x310] sm:$0xff]
  %v959 = vld [vmem:[%s3 + $0x318] sm:$0xff]
  %v960 = vld [vmem:[%s3 + $0x320] sm:$0xff]
  %v961 = vld [vmem:[%s3 + $0x328] sm:$0xff]
  %v962 = vld [vmem:[%s3 + $0x330] sm:$0xff]
  %v963 = vld [vmem:[%s3 + $0x338] sm:$0xff]
  %v964 = vld [vmem:[%s3 + $0x340] sm:$0xff]
  %v965 = vld [vmem:[%s3 + $0x348] sm:$0xff]
  %v966 = vld [vmem:[%s3 + $0x350] sm:$0xff]
  %v967 = vld [vmem:[%s3 + $0x358] sm:$0xff]
  %v968 = vld [vmem:[%s3 + $0x360] sm:$0xff]
  %v969 = vld [vmem:[%s3 + $0x368] sm:$0xff]
  %v970 = vld [vmem:[%s3 + $0x370] sm:$0xff]
  %v971 = vld [vmem:[%s3 + $0x378] sm:$0xff]
  %v972 = vld [vmem:[%s3 + $0x380] sm:$0xff]
  %v973 = vld [vmem:[%s3 + $0x388] sm:$0xff]
  %v974 = vld [vmem:[%s3 + $0x390] sm:$0xff]
  %v975 = vld [vmem:[%s3 + $0x398] sm:$0xff]
  %v976 = vld [vmem:[%s3 + $0x3a0] sm:$0xff]
  %v977 = vld [vmem:[%s3 + $0x3a8] sm:$0xff]
  %v978 = vld [vmem:[%s3 + $0x3b0] sm:$0xff]
  %v979 = vld [vmem:[%s3 + $0x3b8] sm:$0xff]
  %v980 = vld [vmem:[%s3 + $0x3c0] sm:$0xff]
  %v981 = vld [vmem:[%s3 + $0x3c8] sm:$0xff]
  %v982 = vld [vmem:[%s3 + $0x3d0] sm:$0xff]
  %v983 = vld [vmem:[%s3 + $0x3d8] sm:$0xff]
  %v984 = vld [vmem:[%s3 + $0x3e0] sm:$0xff]
  %v985 = vld [vmem:[%s3 + $0x3e8] sm:$0xff]
  %v986 = vld [vmem:[%s3 + $0x3f0] sm:$0xff]
  %v987 = vld [vmem:[%s3 + $0x3f8] sm:$0xff]
  %988 = vmatprep.subr.mxu0 0.0
  %989 = vmatpush1.msra.mxu0 %v860
  %990 = vmatprep.subr.mxu0 0.0
  %991 = vmatpush1.msra.mxu0 %v861
  %992 = vmatprep.subr.mxu0 0.0
  %993 = vmatpush1.msra.mxu0 %v862
  %994 = vmatprep.subr.mxu0 0.0
  %995 = vmatpush1.msra.mxu0 %v863
  %996 = vmatprep.subr.mxu0 0.0
  %997 = vmatpush1.msra.mxu0 %v864
  %998 = vmatprep.subr.mxu0 0.0
  %999 = vmatpush1.msra.mxu0 %v865
  %1000 = vmatprep.subr.mxu0 0.0
  %1001 = vmatpush1.msra.mxu0 %v866
  %1002 = vmatprep.subr.mxu0 0.0
  %1003 = vmatpush1.msra.mxu0 %v867
  %1004 = vmatprep.subr.mxu0 0.0
  %1005 = vmatpush1.msra.mxu0 %v868
  %1006 = vmatprep.subr.mxu0 0.0
  %1007 = vmatpush1.msra.mxu0 %v869
  %1008 = vmatprep.subr.mxu0 0.0
  %1009 = vmatpush1.msra.mxu0 %v870
  %1010 = vmatprep.subr.mxu0 0.0
  %1011 = vmatpush1.msra.mxu0 %v871
  %1012 = vmatprep.subr.mxu0 0.0
  %1013 = vmatpush1.msra.mxu0 %v872
  %1014 = vmatprep.subr.mxu0 0.0
  %1015 = vmatpush1.msra.mxu0 %v873
  %1016 = vmatprep.subr.mxu0 0.0
  %1017 = vmatpush1.msra.mxu0 %v874
  %1018 = vmatprep.subr.mxu0 0.0
  %1019 = vmatpush1.msra.mxu0 %v875
  %1020 = vmatprep.subr.mxu0 0.0
  %1021 = vmatpush1.msra.mxu0 %v876
  %1022 = vmatprep.subr.mxu0 0.0
  %1023 = vmatpush1.msra.mxu0 %v877
  %1024 = vmatprep.subr.mxu0 0.0
  %1025 = vmatpush1.msra.mxu0 %v878
  %1026 = vmatprep.subr.mxu0 0.0
  %1027 = vmatpush1.msra.mxu0 %v879
  %1028 = vmatprep.subr.mxu0 0.0
  %1029 = vmatpush1.msra.mxu0 %v880
  %1030 = vmatprep.subr.mxu0 0.0
  %1031 = vmatpush1.msra.mxu0 %v881
  %1032 = vmatprep.subr.mxu0 0.0
  %1033 = vmatpush1.msra.mxu0 %v882
  %1034 = vmatprep.subr.mxu0 0.0
  %1035 = vmatpush1.msra.mxu0 %v883
  %1036 = vmatprep.subr.mxu0 0.0
  %1037 = vmatpush1.msra.mxu0 %v884
  %1038 = vmatprep.subr.mxu0 0.0
  %1039 = vmatpush1.msra.mxu0 %v885
  %1040 = vmatprep.subr.mxu0 0.0
  %1041 = vmatpush1.msra.mxu0 %v886
  %1042 = vmatprep.subr.mxu0 0.0
  %1043 = vmatpush1.msra.mxu0 %v887
  %1044 = vmatprep.subr.mxu0 0.0
  %1045 = vmatpush1.msra.mxu0 %v888
  %1046 = vmatprep.subr.mxu0 0.0
  %1047 = vmatpush1.msra.mxu0 %v889
  %1048 = vmatprep.subr.mxu0 0.0
  %1049 = vmatpush1.msra.mxu0 %v890
  %1050 = vmatprep.subr.mxu0 0.0
  %1051 = vmatpush1.msra.mxu0 %v891
  %1052 = vmatprep.mubr.f32.mxu0 %v840
  %1053 = vmatmul.mubr.f32.gmra.mrb[0].mxu0 %v839
  %v1054 = vpop.f32.mrb[0].mxu0
  %v1055 = vadd.f32 0.0, %v1054
  %v1056 = vpop.f32.mrb[0].mxu0
  %1057 = vdwg.mxu0
  %1058 = vmatprep.subr.mxu0 0.0
  %1059 = vmatpush1.msra.mxu0 %v892
  %1060 = vmatprep.subr.mxu0 0.0
  %1061 = vmatpush1.msra.mxu0 %v893
  %1062 = vmatprep.subr.mxu0 0.0
  %1063 = vmatpush1.msra.mxu0 %v894
  %1064 = vmatprep.subr.mxu0 0.0
  %1065 = vmatpush1.msra.mxu0 %v895
  %1066 = vmatprep.subr.mxu0 0.0
  %1067 = vmatpush1.msra.mxu0 %v896
  %1068 = vmatprep.subr.mxu0 0.0
  %1069 = vmatpush1.msra.mxu0 %v897
  %1070 = vmatprep.subr.mxu0 0.0
  %1071 = vmatpush1.msra.mxu0 %v898
  %1072 = vmatprep.subr.mxu0 0.0
  %1073 = vmatpush1.msra.mxu0 %v899
  %1074 = vmatprep.subr.mxu0 0.0
  %1075 = vmatpush1.msra.mxu0 %v900
  %1076 = vmatprep.subr.mxu0 0.0
  %1077 = vmatpush1.msra.mxu0 %v901
  %1078 = vmatprep.subr.mxu0 0.0
  %1079 = vmatpush1.msra.mxu0 %v902
  %1080 = vmatprep.subr.mxu0 0.0
  %1081 = vmatpush1.msra.mxu0 %v903
  %1082 = vmatprep.subr.mxu0 0.0
  %1083 = vmatpush1.msra.mxu0 %v904
  %1084 = vmatprep.subr.mxu0 0.0
  %1085 = vmatpush1.msra.mxu0 %v905
  %1086 = vmatprep.subr.mxu0 0.0
  %1087 = vmatpush1.msra.mxu0 %v906
  %1088 = vmatprep.subr.mxu0 0.0
  %1089 = vmatpush1.msra.mxu0 %v907
  %1090 = vmatprep.subr.mxu0 0.0
  %1091 = vmatpush1.msra.mxu0 %v908
  %1092 = vmatprep.subr.mxu0 0.0
  %1093 = vmatpush1.msra.mxu0 %v909
  %1094 = vmatprep.subr.mxu0 0.0
  %1095 = vmatpush1.msra.mxu0 %v910
  %1096 = vmatprep.subr.mxu0 0.0
  %1097 = vmatpush1.msra.mxu0 %v911
  %1098 = vmatprep.subr.mxu0 0.0
  %1099 = vmatpush1.msra.mxu0 %v912
  %1100 = vmatprep.subr.mxu0 0.0
  %1101 = vmatpush1.msra.mxu0 %v913
  %1102 = vmatprep.subr.mxu0 0.0
  %1103 = vmatpush1.msra.mxu0 %v914
  %1104 = vmatprep.subr.mxu0 0.0
  %1105 = vmatpush1.msra.mxu0 %v915
  %1106 = vmatprep.subr.mxu0 0.0
  %1107 = vmatpush1.msra.mxu0 %v916
  %1108 = vmatprep.subr.mxu0 0.0
  %1109 = vmatpush1.msra.mxu0 %v917
  %1110 = vmatprep.subr.mxu0 0.0
  %1111 = vmatpush1.msra.mxu0 %v918
  %1112 = vmatprep.subr.mxu0 0.0
  %1113 = vmatpush1.msra.mxu0 %v919
  %1114 = vmatprep.subr.mxu0 0.0
  %1115 = vmatpush1.msra.mxu0 %v920
  %1116 = vmatprep.subr.mxu0 0.0
  %1117 = vmatpush1.msra.mxu0 %v921
  %1118 = vmatprep.subr.mxu0 0.0
  %1119 = vmatpush1.msra.mxu0 %v922
  %1120 = vmatprep.subr.mxu0 0.0
  %1121 = vmatpush1.msra.mxu0 %v923
  %1122 = vmatprep.mubr.f32.mxu0 %v842
  %1123 = vmatmul.mubr.f32.gmra.mrb[0].mxu0 %v841
  %v1124 = vpop.f32.mrb[0].mxu0
  %v1125 = vadd.f32 %v1055, %v1124
  %v1126 = vpop.f32.mrb[0].mxu0
  %1127 = vdwg.mxu0
  %1128 = vmatprep.subr.mxu0 0.0
  %1129 = vmatpush1.msra.mxu0 %v924
  %1130 = vmatprep.subr.mxu0 0.0
  %1131 = vmatpush1.msra.mxu0 %v925
  %1132 = vmatprep.subr.mxu0 0.0
  %1133 = vmatpush1.msra.mxu0 %v926
  %1134 = vmatprep.subr.mxu0 0.0
  %1135 = vmatpush1.msra.mxu0 %v927
  %1136 = vmatprep.subr.mxu0 0.0
  %1137 = vmatpush1.msra.mxu0 %v928
  %1138 = vmatprep.subr.mxu0 0.0
  %1139 = vmatpush1.msra.mxu0 %v929
  %1140 = vmatprep.subr.mxu0 0.0
  %1141 = vmatpush1.msra.mxu0 %v930
  %1142 = vmatprep.subr.mxu0 0.0
  %1143 = vmatpush1.msra.mxu0 %v931
  %1144 = vmatprep.subr.mxu0 0.0
  %1145 = vmatpush1.msra.mxu0 %v932
  %1146 = vmatprep.subr.mxu0 0.0
  %1147 = vmatpush1.msra.mxu0 %v933
  %1148 = vmatprep.subr.mxu0 0.0
  %1149 = vmatpush1.msra.mxu0 %v934
  %1150 = vmatprep.subr.mxu0 0.0
  %1151 = vmatpush1.msra.mxu0 %v935
  %1152 = vmatprep.subr.mxu0 0.0
  %1153 = vmatpush1.msra.mxu0 %v936
  %1154 = vmatprep.subr.mxu0 0.0
  %1155 = vmatpush1.msra.mxu0 %v937
  %1156 = vmatprep.subr.mxu0 0.0
  %1157 = vmatpush1.msra.mxu0 %v938
  %1158 = vmatprep.subr.mxu0 0.0
  %1159 = vmatpush1.msra.mxu0 %v939
  %1160 = vmatprep.subr.mxu0 0.0
  %1161 = vmatpush1.msra.mxu0 %v940
  %1162 = vmatprep.subr.mxu0 0.0
  %1163 = vmatpush1.msra.mxu0 %v941
  %1164 = vmatprep.subr.mxu0 0.0
  %1165 = vmatpush1.msra.mxu0 %v942
  %1166 = vmatprep.subr.mxu0 0.0
  %1167 = vmatpush1.msra.mxu0 %v943
  %1168 = vmatprep.subr.mxu0 0.0
  %1169 = vmatpush1.msra.mxu0 %v944
  %1170 = vmatprep.subr.mxu0 0.0
  %1171 = vmatpush1.msra.mxu0 %v945
  %1172 = vmatprep.subr.mxu0 0.0
  %1173 = vmatpush1.msra.mxu0 %v946
  %1174 = vmatprep.subr.mxu0 0.0
  %1175 = vmatpush1.msra.mxu0 %v947
  %1176 = vmatprep.subr.mxu0 0.0
  %1177 = vmatpush1.msra.mxu0 %v948
  %1178 = vmatprep.subr.mxu0 0.0
  %1179 = vmatpush1.msra.mxu0 %v949
  %1180 = vmatprep.subr.mxu0 0.0
  %1181 = vmatpush1.msra.mxu0 %v950
  %1182 = vmatprep.subr.mxu0 0.0
  %1183 = vmatpush1.msra.mxu0 %v951
  %1184 = vmatprep.subr.mxu0 0.0
  %1185 = vmatpush1.msra.mxu0 %v952
  %1186 = vmatprep.subr.mxu0 0.0
  %1187 = vmatpush1.msra.mxu0 %v953
  %1188 = vmatprep.subr.mxu0 0.0
  %1189 = vmatpush1.msra.mxu0 %v954
  %1190 = vmatprep.subr.mxu0 0.0
  %1191 = vmatpush1.msra.mxu0 %v955
  %1192 = vmatprep.mubr.f32.mxu0 %v844
  %1193 = vmatmul.mubr.f32.gmra.mrb[0].mxu0 %v843
  %v1194 = vpop.f32.mrb[0].mxu0
  %v1195 = vadd.f32 %v1125, %v1194
  %v1196 = vpop.f32.mrb[0].mxu0
  %1197 = vdwg.mxu0
  %1198 = vmatprep.subr.mxu0 0.0
  %1199 = vmatpush1.msra.mxu0 %v956
  %1200 = vmatprep.subr.mxu0 0.0
  %1201 = vmatpush1.msra.mxu0 %v957
  %1202 = vmatprep.subr.mxu0 0.0
  %1203 = vmatpush1.msra.mxu0 %v958
  %1204 = vmatprep.subr.mxu0 0.0
  %1205 = vmatpush1.msra.mxu0 %v959
  %1206 = vmatprep.subr.mxu0 0.0
  %1207 = vmatpush1.msra.mxu0 %v960
  %1208 = vmatprep.subr.mxu0 0.0
  %1209 = vmatpush1.msra.mxu0 %v961
  %1210 = vmatprep.subr.mxu0 0.0
  %1211 = vmatpush1.msra.mxu0 %v962
  %1212 = vmatprep.subr.mxu0 0.0
  %1213 = vmatpush1.msra.mxu0 %v963
  %1214 = vmatprep.subr.mxu0 0.0
  %1215 = vmatpush1.msra.mxu0 %v964
  %1216 = vmatprep.subr.mxu0 0.0
  %1217 = vmatpush1.msra.mxu0 %v965
  %1218 = vmatprep.subr.mxu0 0.0
  %1219 = vmatpush1.msra.mxu0 %v966
  %1220 = vmatprep.subr.mxu0 0.0
  %1221 = vmatpush1.msra.mxu0 %v967
  %1222 = vmatprep.subr.mxu0 0.0
  %1223 = vmatpush1.msra.mxu0 %v968
  %1224 = vmatprep.subr.mxu0 0.0
  %1225 = vmatpush1.msra.mxu0 %v969
  %1226 = vmatprep.subr.mxu0 0.0
  %1227 = vmatpush1.msra.mxu0 %v970
  %1228 = vmatprep.subr.mxu0 0.0
  %1229 = vmatpush1.msra.mxu0 %v971
  %1230 = vmatprep.subr.mxu0 0.0
  %1231 = vmatpush1.msra.mxu0 %v972
  %1232 = vmatprep.subr.mxu0 0.0
  %1233 = vmatpush1.msra.mxu0 %v973
  %1234 = vmatprep.subr.mxu0 0.0
  %1235 = vmatpush1.msra.mxu0 %v974
  %1236 = vmatprep.subr.mxu0 0.0
  %1237 = vmatpush1.msra.mxu0 %v975
  %1238 = vmatprep.subr.mxu0 0.0
  %1239 = vmatpush1.msra.mxu0 %v976
  %1240 = vmatprep.subr.mxu0 0.0
  %1241 = vmatpush1.msra.mxu0 %v977
  %1242 = vmatprep.subr.mxu0 0.0
  %1243 = vmatpush1.msra.mxu0 %v978
  %1244 = vmatprep.subr.mxu0 0.0
  %1245 = vmatpush1.msra.mxu0 %v979
  %1246 = vmatprep.subr.mxu0 0.0
  %1247 = vmatpush1.msra.mxu0 %v980
  %1248 = vmatprep.subr.mxu0 0.0
  %1249 = vmatpush1.msra.mxu0 %v981
  %1250 = vmatprep.subr.mxu0 0.0
  %1251 = vmatpush1.msra.mxu0 %v982
  %1252 = vmatprep.subr.mxu0 0.0
  %1253 = vmatpush1.msra.mxu0 %v983
  %1254 = vmatprep.subr.mxu0 0.0
  %1255 = vmatpush1.msra.mxu0 %v984
  %1256 = vmatprep.subr.mxu0 0.0
  %1257 = vmatpush1.msra.mxu0 %v985
  %1258 = vmatprep.subr.mxu0 0.0
  %1259 = vmatpush1.msra.mxu0 %v986
  %1260 = vmatprep.subr.mxu0 0.0
  %1261 = vmatpush1.msra.mxu0 %v987
  %1262 = vmatprep.mubr.f32.mxu0 %v846
  %1263 = vmatmul.mubr.f32.gmra.mrb[0].mxu0 %v845
  %v1264 = vpop.f32.mrb[0].mxu0
  %v1265 = vadd.f32 %v1195, %v1264
  %v1266 = vpop.f32.mrb[0].mxu0
  %1267 = vdwg.mxu0
  %v1268 = vadd.f32 %v859, %v1265
  %1269 = vst [vmem:[%s5] sm:$0xff] %v1268
  // Predicated region
  $region26: #{attack_dict_forward.1} parent=0 // pred_check
    _
  $region27: #{attack_dict_forward.1} parent=0 // pred_check_branch
    %1271 = sbr.rel (0) target = $region29
  $region28: #{attack_dict_forward.1} parent=0 // pred_region
    _
  $region29: #{attack_dict_forward.1} parent=0 // pred_fallthru
    _
  // Predicated region
  $region30: #{attack_dict_forward.1} parent=0 // pred_check
    _
  $region31: #{attack_dict_forward.1} parent=0 // pred_check_branch
    %1273 = sbr.rel (0) target = $region33
  $region32: #{attack_dict_forward.1} parent=0 // pred_region
    _
  $region33: #{attack_dict_forward.1} parent=0 // pred_fallthru
    _
  // Predicated region
  $region34: #{attack_dict_forward.1} parent=0 // pred_check
    _
  $region35: #{attack_dict_forward.1} parent=0 // pred_check_branch
    %1275 = sbr.rel (0) target = $region37
  $region36: #{attack_dict_forward.1} parent=0 // pred_region
    _
  $region37: #{attack_dict_forward.1} parent=0 // pred_fallthru
    _
  // Predicated region
  $region38: #{attack_dict_forward.1} parent=0 // pred_check
    _
  $region39: #{attack_dict_forward.1} parent=0 // pred_check_branch
    %1277 = sbr.rel (0) target = $region41
  $region40: #{attack_dict_forward.1} parent=0 // pred_region
    _
  $region41: #{attack_dict_forward.1} parent=0 // pred_fallthru
    _

</llo_original>
